<compile_context>
chip_gen: v7x
topology: tpu7x:2x2x1
jax: 0.10.0
libtpu: 0.0.40
codegen_flags: <defaults>
</compile_context>

<pallas_src>
import functools

import jax
import jax.numpy as jnp
from jax import lax
from jax.experimental import pallas as pl
from jax.experimental.pallas import tpu as pltpu

_MIB = 1024 * 1024


def _vmem_limit_bytes():
    """Generation-aware scoped-VMEM budget: physical capacity minus headroom.

    v5e/v6e (128 MiB physical) -> 112 MiB; v7x (64 MiB) -> 48 MiB; fallback 48 MiB.
    """
    try:
        cap = int(pltpu.get_tpu_info().vmem_capacity_bytes)
    except Exception:
        cap = 64 * _MIB
    return int(max(32 * _MIB, min(cap - 16 * _MIB, 112 * _MIB)))


def _pick_tile(dim, target, multiple=8):
    """Largest divisor of `dim` that is a multiple of `multiple` and <= target.

    Falls back to 8-alignment, then to `dim` itself, for awkward shapes.
    """
    if dim <= target:
        return dim
    t = (target // multiple) * multiple
    while t >= multiple:
        if dim % t == 0:
            return t
        t -= multiple
    if multiple > 8:
        return _pick_tile(dim, target, 8)
    return dim


# ----------------------------- stage 1: Q/K/V projections ------------------------------
def _qkv_proj_kernel(xq_ref, xk_ref, xv_ref, wq_ref, wk_ref, wv_ref,
                     q_ref, k_ref, v_ref):
    # Blocks: x*_ref (tr, D) already in compute dtype; w*_ref (D, D) transposed to
    # (in, out) on the host (softmax scale folded into wq) -> y = x @ w_t == x @ W.T.
    def proj(x_ref, w_ref, out_ref):
        out_ref[...] = jnp.dot(
            x_ref[...], w_ref[...],
            preferred_element_type=jnp.float32).astype(out_ref.dtype)

    proj(xq_ref, wq_ref, q_ref)
    proj(xk_ref, wk_ref, k_ref)
    proj(xv_ref, wv_ref, v_ref)


# -------------------- stage 2: attention + fused output projection ---------------------
def _attn_kernel(q_ref, k_ref, v_ref, wo_ref, o_ref, cat_ref,
                 *, head_count, kv_chunk, compute_dtype, approx_recip):
    # Block shapes (leading batch/tile dims squeezed away by the BlockSpecs):
    #   q_ref  : (tq, D)   query tile, all heads (static lane slice per head)
    #   k_ref  : (S,  D)   whole-batch keys   (VMEM-resident across q-tiles)
    #   v_ref  : (S,  D)   whole-batch values (VMEM-resident across q-tiles)
    #   wo_ref : (D,  D)   W_o^T, resident for the whole grid
    #   o_ref  : (tq, D)   output tile (lane-dense in D)
    #   cat_ref: (tq, D)   VMEM scratch holding the concatenated head outputs
    tq, d_model = q_ref.shape
    seq = k_ref.shape[0]
    d_k = d_model // head_count
    num_chunks = seq // kv_chunk

    for h in range(head_count):                 # static loop -> all slices static
        lo = h * d_k
        hi = lo + d_k
        q_h = q_ref[:, lo:hi].astype(compute_dtype)   # (tq, d_k); 1/sqrt(d_k) in W_q

        def kv_step(i, carry, _lo=lo, _hi=hi, _q=q_h):
            m_prev, l_prev, acc_prev = carry
            start = pl.multiple_of(i * kv_chunk, kv_chunk)
            k_c = k_ref[pl.ds(start, kv_chunk), _lo:_hi].astype(compute_dtype)
            v_c = v_ref[pl.ds(start, kv_chunk), _lo:_hi].astype(compute_dtype)
            # Scores: contract d_k of q against d_k of k (no in-kernel transpose).
            s = lax.dot_general(_q, k_c, (((1,), (1,)), ((), ())),
                                preferred_element_type=jnp.float32)   # (tq, kc) f32
            # TODO(synk): an optional mask would be applied to `s` here, before the
            #             running-max update (mask=None in this forward).
            m_new = jnp.maximum(m_prev, jnp.max(s, axis=-1, keepdims=True))
            alpha = jnp.exp(m_prev - m_new)
            p = jnp.exp(s - m_new)
            l_new = alpha * l_prev + jnp.sum(p, axis=-1, keepdims=True)
            acc_new = alpha * acc_prev + jnp.dot(
                p.astype(compute_dtype), v_c, preferred_element_type=jnp.float32)
            return m_new, l_new, acc_new

        init = (jnp.full((tq, 1), -jnp.inf, jnp.float32),
                jnp.zeros((tq, 1), jnp.float32),
                jnp.zeros((tq, d_k), jnp.float32))
        _, l_fin, acc_fin = lax.fori_loop(0, num_chunks, kv_step, init,
                                          unroll=num_chunks <= 8)

        inv_l = pl.reciprocal(l_fin, approx=approx_recip)              # EUP slot
        cat_ref[:, lo:hi] = (acc_fin * inv_l).astype(cat_ref.dtype)    # static lane slice

    # Single full-width output projection: (tq, D) @ (D, D), D-wide MXU contraction.
    o_ref[...] = jnp.dot(cat_ref[...], wo_ref[...],
                         preferred_element_type=jnp.float32).astype(o_ref.dtype)


# --------------------------------------- wrapper ----------------------------------------
def attention_pallas(enc_q, enc_k, enc_v, w_q, w_k, w_v, w_o, head_count,
                     *, compute_dtype=jnp.bfloat16, approx_recip=None,
                     q_tile=512, kv_chunk=512, row_tile=512):
    B, S, D = enc_q.shape
    if D % head_count != 0:
        raise ValueError("`head_count` is not divisor of `d_model`")
    d_k = D // head_count
    scale = 1.0 / (d_k ** 0.5)
    out_dtype = enc_q.dtype
    if approx_recip is None:
        approx_recip = compute_dtype != jnp.float32

    # One-time host-side prep (plain XLA, outside the kernels): transpose torch
    # (out, in) weights to (in, out), fold the softmax scale into W_q, cast weights
    # and activations to the MXU compute dtype (halves stage-1 input DMA bytes).
    wq_t = (w_q.astype(jnp.float32) * scale).T.astype(compute_dtype)   # (D_in, D_out)
    wk_t = w_k.astype(compute_dtype).T
    wv_t = w_v.astype(compute_dtype).T
    wo_t = w_o.astype(compute_dtype).T                                  # (D_in, D_out)
    xq = enc_q.astype(compute_dtype)
    xk = enc_k.astype(compute_dtype)
    xv = enc_v.astype(compute_dtype)

    # Lane/sublane-aware tiles: sublane multiple of 16 for packed bf16, kv chunk a
    # multiple of 128 (it is the lane dim of the score tile and the N dim of p@v).
    sub = 16 if jnp.dtype(compute_dtype).itemsize < 4 else 8
    tr = _pick_tile(S, row_tile, sub)
    tq = _pick_tile(S, q_tile, sub)
    kc = _pick_tile(S, kv_chunk, 128)
    n_r, n_q = S // tr, S // tq

    vmem_limit = _vmem_limit_bytes()
    cd_bytes = jnp.dtype(compute_dtype).itemsize
    io_bytes = jnp.dtype(out_dtype).itemsize

    # ---- stage 1: fused Q/K/V projections, grid (B, S/tr), weights resident ----
    x_spec = pl.BlockSpec((None, tr, D), lambda b, i: (b, i, 0))
    # Constant index_map -> each (D, D) weight is DMA'd exactly once for the grid.
    w_spec = pl.BlockSpec((D, D), lambda b, i: (0, 0))

    proj_cost = pl.CostEstimate(
        flops=2 * 3 * B * S * D * D,
        transcendentals=0,
        bytes_accessed=6 * B * S * D * cd_bytes + 3 * D * D * cd_bytes)

    q, k, v = pl.pallas_call(
        _qkv_proj_kernel,
        out_shape=tuple(jax.ShapeDtypeStruct((B, S, D), compute_dtype)
                        for _ in range(3)),
        grid=(B, n_r),
        in_specs=[x_spec, x_spec, x_spec, w_spec, w_spec, w_spec],
        out_specs=(x_spec, x_spec, x_spec),
        compiler_params=pltpu.CompilerParams(
            dimension_semantics=("parallel", "parallel"),
            vmem_limit_bytes=vmem_limit),
        cost_estimate=proj_cost,
    )(xq, xk, xv, wq_t, wk_t, wv_t)

    # ---- stage 2: attention + fused output projection, grid (B, S/tq) ----
    q_spec = pl.BlockSpec((None, tq, D), lambda b, qi: (b, qi, 0))
    # K/V block index ignores the q-tile axis -> fetched once per batch row and
    # kept VMEM-resident while all q-tiles / heads stream past them.
    kv_spec = pl.BlockSpec((None, S, D), lambda b, qi: (b, 0, 0))
    wo_spec = pl.BlockSpec((D, D), lambda b, qi: (0, 0))
    out_spec = pl.BlockSpec((None, tq, D), lambda b, qi: (b, qi, 0))

    flash_cost = pl.CostEstimate(
        flops=4 * B * S * S * D + 2 * B * S * D * D,
        transcendentals=B * head_count * S * S,
        bytes_accessed=(3 * B * S * D + D * D) * cd_bytes + B * S * D * io_bytes)

    out = pl.pallas_call(
        functools.partial(_attn_kernel, head_count=head_count, kv_chunk=kc,
                          compute_dtype=compute_dtype, approx_recip=approx_recip),
        out_shape=jax.ShapeDtypeStruct((B, S, D), out_dtype),
        grid=(B, n_q),
        in_specs=[q_spec, kv_spec, kv_spec, wo_spec],
        out_specs=out_spec,
        scratch_shapes=[pltpu.VMEM((tq, D), compute_dtype)],   # concatenated heads
        compiler_params=pltpu.CompilerParams(
            # No cross-step accumulation -> both axes independent; B*n_q >= 2
            # keeps both v7x TensorCores busy.
            dimension_semantics=("parallel", "parallel"),
            vmem_limit_bytes=vmem_limit),
        cost_estimate=flash_cost,
    )(q, k, v, wo_t)

    return out


# -------------------------------------- reference ---------------------------------------
def attention_ref(enc_q, enc_k, enc_v, w_q, w_k, w_v, w_o, head_count):
    """Pure-JAX reference mirroring the PyTorch forward exactly (f32)."""
    B, S, D = enc_q.shape
    d_k = D // head_count

    def proj(x, w):
        y = jnp.einsum("bsd,od->bso", x, w)                             # nn.Linear, no bias
        return y.reshape(B, S, head_count, d_k).transpose(0, 2, 1, 3)   # (B, H, S, d_k)

    q = proj(enc_q, w_q)
    k = proj(enc_k, w_k)
    v = proj(enc_v, w_v)
    scores = jnp.einsum("bhqd,bhkd->bhqk", q, k) / (d_k ** 0.5)
    attn = jax.nn.softmax(scores, axis=-1)
    out = jnp.einsum("bhqk,bhkd->bhqd", attn, v)
    out = out.transpose(0, 2, 1, 3).reshape(B, S, D)
    return jnp.einsum("bsd,od->bso", out, w_o)


if __name__ == "__main__":
    def run_case(B, S, D, H, *, bf16_tol, f32_tol, **tiles):
        key = jax.random.PRNGKey(0)
        kq, kk, kvk, kwq, kwk, kwv, kwo = jax.random.split(key, 7)
        enc_q = jax.random.normal(kq, (B, S, D), dtype=jnp.float32)
        enc_k = jax.random.normal(kk, (B, S, D), dtype=jnp.float32)
        enc_v = jax.random.normal(kvk, (B, S, D), dtype=jnp.float32)

        # nn.Linear(d_model, d_model, bias=False) weights: shape (out, in) = (D, D)
        bound = 1.0 / (D ** 0.5)
        w_q = jax.random.uniform(kwq, (D, D), jnp.float32, -bound, bound)
        w_k = jax.random.uniform(kwk, (D, D), jnp.float32, -bound, bound)
        w_v = jax.random.uniform(kwv, (D, D), jnp.float32, -bound, bound)
        w_o = jax.random.uniform(kwo, (D, D), jnp.float32, -bound, bound)

        ref = attention_ref(enc_q, enc_k, enc_v, w_q, w_k, w_v, w_o, H)

        # Fast path: bf16 MXU operands, f32 accumulation & softmax statistics.
        out_bf16 = jax.block_until_ready(attention_pallas(
            enc_q, enc_k, enc_v, w_q, w_k, w_v, w_o, H,
            compute_dtype=jnp.bfloat16, **tiles))
        assert out_bf16.shape == (B, S, D)
        assert jnp.allclose(out_bf16, ref, atol=bf16_tol[0], rtol=bf16_tol[1]), \
            f"bf16 path mismatch at shape {(B, S, D, H)}"

        # Exact path: full f32 compute, tight tolerance vs reference.
        out_f32 = jax.block_until_ready(attention_pallas(
            enc_q, enc_k, enc_v, w_q, w_k, w_v, w_o, H,
            compute_dtype=jnp.float32, **tiles))
        assert out_f32.shape == (B, S, D)
        assert jnp.allclose(out_f32, ref, atol=f32_tol[0], rtol=f32_tol[1]), \
            f"f32 path mismatch at shape {(B, S, D, H)}"

    # Small module-consistent shape: batch=2, seq=8, d_model=32, heads=4 (d_k=8).
    run_case(2, 8, 32, 4, bf16_tol=(5e-2, 5e-2), f32_tol=(1e-4, 1e-4))

    # Lane-aligned shape (d_k=128) exercising multiple q-tiles, multiple kv chunks
    # in the in-kernel fori_loop, and multi-row-tile stage 1.
    run_case(2, 256, 256, 2, bf16_tol=(1e-1, 5e-2), f32_tol=(2e-3, 2e-3),
             q_tile=128, kv_chunk=128, row_tile=128)

    print("KERNEL_OK")
</pallas_src>

<mosaic_0001>
module attributes {stable_mosaic.version = 11 : i64} {
  func.func @_qkv_proj_kernel(%arg0: i32, %arg1: i32, %arg2: memref<1x8x32xbf16, #tpu.memory_space<vmem>>, %arg3: memref<1x8x32xbf16, #tpu.memory_space<vmem>>, %arg4: memref<1x8x32xbf16, #tpu.memory_space<vmem>>, %arg5: memref<32x32xbf16, #tpu.memory_space<vmem>>, %arg6: memref<32x32xbf16, #tpu.memory_space<vmem>>, %arg7: memref<32x32xbf16, #tpu.memory_space<vmem>>, %arg8: memref<1x8x32xbf16, #tpu.memory_space<vmem>>, %arg9: memref<1x8x32xbf16, #tpu.memory_space<vmem>>, %arg10: memref<1x8x32xbf16, #tpu.memory_space<vmem>>) attributes {dimension_semantics = [#tpu.dimension_semantics<parallel>, #tpu.dimension_semantics<parallel>], iteration_bounds = array<i64: 2, 1>, scalar_prefetch = 0 : i64, scratch_operands = 0 : i64, tpu.core_type = #tpu.core_type<tc>, window_params = [{transform_indices = @transform_0, window_bounds = array<i64: 1, 8, 32>}, {transform_indices = @transform_1, window_bounds = array<i64: 1, 8, 32>}, {transform_indices = @transform_2, window_bounds = array<i64: 1, 8, 32>}, {pipeline_mode = #tpu.pipeline_mode<synchronous>, transform_indices = @transform_3, window_bounds = array<i64: 32, 32>}, {pipeline_mode = #tpu.pipeline_mode<synchronous>, transform_indices = @transform_4, window_bounds = array<i64: 32, 32>}, {pipeline_mode = #tpu.pipeline_mode<synchronous>, transform_indices = @transform_5, window_bounds = array<i64: 32, 32>}, {transform_indices = @transform_6, window_bounds = array<i64: 1, 8, 32>}, {transform_indices = @transform_7, window_bounds = array<i64: 1, 8, 32>}, {transform_indices = @transform_8, window_bounds = array<i64: 1, 8, 32>}]} {
    %c0 = arith.constant 0 : index
    %c0_0 = arith.constant 0 : index
    %c0_1 = arith.constant 0 : index
    %0 = vector.load %arg2[%c0, %c0_0, %c0_1] : memref<1x8x32xbf16, #tpu.memory_space<vmem>>, vector<1x8x32xbf16>
    %1 = vector.shape_cast %0 : vector<1x8x32xbf16> to vector<8x32xbf16>
    %c0_2 = arith.constant 0 : index
    %c0_3 = arith.constant 0 : index
    %2 = vector.load %arg5[%c0_2, %c0_3] : memref<32x32xbf16, #tpu.memory_space<vmem>>, vector<32x32xbf16>
    %cst = arith.constant dense<0.000000e+00> : vector<8x32xf32>
    %3 = tpu.matmul %1, %2, %cst {dimension_numbers = #tpu.dot_dimension_numbers<[1], [0], [0], [1], [0, 0, 1, 1], [], []>} : vector<8x32xbf16>, vector<32x32xbf16>, vector<8x32xf32> -> vector<8x32xf32>
    %4 = arith.truncf %3 : vector<8x32xf32> to vector<8x32xbf16>
    %c0_4 = arith.constant 0 : index
    %c0_5 = arith.constant 0 : index
    %c0_6 = arith.constant 0 : index
    %5 = vector.load %arg8[%c0_4, %c0_5, %c0_6] : memref<1x8x32xbf16, #tpu.memory_space<vmem>>, vector<1x8x32xbf16>
    %6 = vector.shape_cast %5 : vector<1x8x32xbf16> to vector<8x32xbf16>
    %7 = vector.shape_cast %4 : vector<8x32xbf16> to vector<1x8x32xbf16>
    tpu.vector_store %arg8[%c0_4, %c0_5, %c0_6], %7 {strides = array<i32>} : memref<1x8x32xbf16, #tpu.memory_space<vmem>>, vector<1x8x32xbf16>,
    %c0_7 = arith.constant 0 : index
    %c0_8 = arith.constant 0 : index
    %c0_9 = arith.constant 0 : index
    %8 = vector.load %arg3[%c0_7, %c0_8, %c0_9] : memref<1x8x32xbf16, #tpu.memory_space<vmem>>, vector<1x8x32xbf16>
    %9 = vector.shape_cast %8 : vector<1x8x32xbf16> to vector<8x32xbf16>
    %c0_10 = arith.constant 0 : index
    %c0_11 = arith.constant 0 : index
    %10 = vector.load %arg6[%c0_10, %c0_11] : memref<32x32xbf16, #tpu.memory_space<vmem>>, vector<32x32xbf16>
    %cst_12 = arith.constant dense<0.000000e+00> : vector<8x32xf32>
    %11 = tpu.matmul %9, %10, %cst_12 {dimension_numbers = #tpu.dot_dimension_numbers<[1], [0], [0], [1], [0, 0, 1, 1], [], []>} : vector<8x32xbf16>, vector<32x32xbf16>, vector<8x32xf32> -> vector<8x32xf32>
    %12 = arith.truncf %11 : vector<8x32xf32> to vector<8x32xbf16>
    %c0_13 = arith.constant 0 : index
    %c0_14 = arith.constant 0 : index
    %c0_15 = arith.constant 0 : index
    %13 = vector.load %arg9[%c0_13, %c0_14, %c0_15] : memref<1x8x32xbf16, #tpu.memory_space<vmem>>, vector<1x8x32xbf16>
    %14 = vector.shape_cast %13 : vector<1x8x32xbf16> to vector<8x32xbf16>
    %15 = vector.shape_cast %12 : vector<8x32xbf16> to vector<1x8x32xbf16>
    tpu.vector_store %arg9[%c0_13, %c0_14, %c0_15], %15 {strides = array<i32>} : memref<1x8x32xbf16, #tpu.memory_space<vmem>>, vector<1x8x32xbf16>,
    %c0_16 = arith.constant 0 : index
    %c0_17 = arith.constant 0 : index
    %c0_18 = arith.constant 0 : index
    %16 = vector.load %arg4[%c0_16, %c0_17, %c0_18] : memref<1x8x32xbf16, #tpu.memory_space<vmem>>, vector<1x8x32xbf16>
    %17 = vector.shape_cast %16 : vector<1x8x32xbf16> to vector<8x32xbf16>
    %c0_19 = arith.constant 0 : index
    %c0_20 = arith.constant 0 : index
    %18 = vector.load %arg7[%c0_19, %c0_20] : memref<32x32xbf16, #tpu.memory_space<vmem>>, vector<32x32xbf16>
    %cst_21 = arith.constant dense<0.000000e+00> : vector<8x32xf32>
    %19 = tpu.matmul %17, %18, %cst_21 {dimension_numbers = #tpu.dot_dimension_numbers<[1], [0], [0], [1], [0, 0, 1, 1], [], []>} : vector<8x32xbf16>, vector<32x32xbf16>, vector<8x32xf32> -> vector<8x32xf32>
    %20 = arith.truncf %19 : vector<8x32xf32> to vector<8x32xbf16>
    %c0_22 = arith.constant 0 : index
    %c0_23 = arith.constant 0 : index
    %c0_24 = arith.constant 0 : index
    %21 = vector.load %arg10[%c0_22, %c0_23, %c0_24] : memref<1x8x32xbf16, #tpu.memory_space<vmem>>, vector<1x8x32xbf16>
    %22 = vector.shape_cast %21 : vector<1x8x32xbf16> to vector<8x32xbf16>
    %23 = vector.shape_cast %20 : vector<8x32xbf16> to vector<1x8x32xbf16>
    tpu.vector_store %arg10[%c0_22, %c0_23, %c0_24], %23 {strides = array<i32>} : memref<1x8x32xbf16, #tpu.memory_space<vmem>>, vector<1x8x32xbf16>,
    return
  }
  func.func @transform_0(%arg0: i32, %arg1: i32) -> (i32, i32, i32) {
    %c0_i32 = arith.constant 0 : i32
    %c0_i32_0 = arith.constant 0 : i32
    return %arg0, %arg1, %c0_i32 : i32, i32, i32
  }
  func.func @transform_1(%arg0: i32, %arg1: i32) -> (i32, i32, i32) {
    %c0_i32 = arith.constant 0 : i32
    %c0_i32_0 = arith.constant 0 : i32
    return %arg0, %arg1, %c0_i32 : i32, i32, i32
  }
  func.func @transform_2(%arg0: i32, %arg1: i32) -> (i32, i32, i32) {
    %c0_i32 = arith.constant 0 : i32
    %c0_i32_0 = arith.constant 0 : i32
    return %arg0, %arg1, %c0_i32 : i32, i32, i32
  }
  func.func @transform_3(%arg0: i32, %arg1: i32) -> (i32, i32) {
    %c0_i32 = arith.constant 0 : i32
    %c0_i32_0 = arith.constant 0 : i32
    %c0_i32_1 = arith.constant 0 : i32
    return %c0_i32, %c0_i32_0 : i32, i32
  }
  func.func @transform_4(%arg0: i32, %arg1: i32) -> (i32, i32) {
    %c0_i32 = arith.constant 0 : i32
    %c0_i32_0 = arith.constant 0 : i32
    %c0_i32_1 = arith.constant 0 : i32
    return %c0_i32, %c0_i32_0 : i32, i32
  }
  func.func @transform_5(%arg0: i32, %arg1: i32) -> (i32, i32) {
    %c0_i32 = arith.constant 0 : i32
    %c0_i32_0 = arith.constant 0 : i32
    %c0_i32_1 = arith.constant 0 : i32
    return %c0_i32, %c0_i32_0 : i32, i32
  }
  func.func @transform_6(%arg0: i32, %arg1: i32) -> (i32, i32, i32) {
    %c0_i32 = arith.constant 0 : i32
    %c0_i32_0 = arith.constant 0 : i32
    return %arg0, %arg1, %c0_i32 : i32, i32, i32
  }
  func.func @transform_7(%arg0: i32, %arg1: i32) -> (i32, i32, i32) {
    %c0_i32 = arith.constant 0 : i32
    %c0_i32_0 = arith.constant 0 : i32
    return %arg0, %arg1, %c0_i32 : i32, i32, i32
  }
  func.func @transform_8(%arg0: i32, %arg1: i32) -> (i32, i32, i32) {
    %c0_i32 = arith.constant 0 : i32
    %c0_i32_0 = arith.constant 0 : i32
    return %arg0, %arg1, %c0_i32 : i32, i32, i32
  }
}

</mosaic_0001>

<llo_original>
// kernel: tpu_custom_call.1
$region0: #{tpu_custom_call.1}
  #allocation0 [shape = 'u32[]', space=smem, size = 0x4, offset = 0x4, fixed_abs, tag = 'smem constant byte address 0x4 - core index']
  #allocation1 [shape = 'u32[144,128]{1,0:T(1,128)}', space=vmem, size = 0x12000, scoped, tag = 'internal scratch']
  %s0 = inlined_call_operand.hbm [shape: bf16[2,8,32], index: 0, kind: input, shape index: {}]
  %s1 = inlined_call_operand.hbm [shape: bf16[2,8,32], index: 1, kind: input, shape index: {}]
  %s2 = inlined_call_operand.hbm [shape: bf16[2,8,32], index: 2, kind: input, shape index: {}]
  %s3 = inlined_call_operand.hbm [shape: bf16[32,32], index: 3, kind: input, shape index: {}]
  %s4 = inlined_call_operand.hbm [shape: bf16[32,32], index: 4, kind: input, shape index: {}]
  %s5 = inlined_call_operand.vmem [shape: bf16[32,32], index: 5, kind: input, shape index: {}]
  %s6 = inlined_call_operand.hbm [shape: bf16[2,8,32], index: 6, kind: output, shape index: {0}]
  %s7 = inlined_call_operand.hbm [shape: bf16[2,8,32], index: 7, kind: output, shape index: {1}]
  %s8 = inlined_call_operand.hbm [shape: bf16[2,8,32], index: 8, kind: output, shape index: {2}]
  %9 = xla_tuple %s6, %s7, %s8
  %s10 = sld [smem:[#allocation0]]
  $region93: #{tpu_custom_call.1} parent=0
    _
  %s12 = ssub.s32 1, %s10
  %s13 = scalar_select 0, %s12, %s10
  $region1: #{tpu_custom_call.1} parent=0
    #allocation2 [shape = 'u8[4096]{0}', space=vmem, size = 0x1000, scoped, tag = 'input window, operand 0']
    #allocation3 [shape = 's32[2]{0}', space=sflag, size = 0x8, scoped, tag = 'scoped memory for tpu_custom_call.1']
    #allocation4 [shape = 's32[2]{0}', space=sflag, size = 0x8, scoped, tag = 'scoped memory for tpu_custom_call.1']
    #allocation5 [shape = 'u8[4096]{0}', space=vmem, size = 0x1000, scoped, tag = 'input window, operand 1']
    #allocation6 [shape = 's32[2]{0}', space=sflag, size = 0x8, scoped, tag = 'scoped memory for tpu_custom_call.1']
    #allocation7 [shape = 'u8[4096]{0}', space=vmem, size = 0x1000, scoped, tag = 'input window, operand 2']
    #allocation8 [shape = 'u8[8192]{0}', space=vmem, size = 0x2000, scoped, tag = 'input window, operand 3, single buffered']
    #allocation9 [shape = 's32[1]{0}', space=sflag, size = 0x4, scoped, tag = 'scoped memory for tpu_custom_call.1']
    #allocation10 [shape = 'u8[8192]{0}', space=vmem, size = 0x2000, scoped, tag = 'input window, operand 4, single buffered']
    #allocation11 [shape = 'u8[4096]{0}', space=vmem, size = 0x1000, scoped, tag = 'output window, operand 0']
    #allocation12 [shape = 'u8[4096]{0}', space=vmem, size = 0x1000, scoped, tag = 'output window, operand 1']
    #allocation13 [shape = 's32[2]{0}', space=sflag, size = 0x8, scoped, tag = 'scoped memory for tpu_custom_call.1']
    #allocation14 [shape = 'u8[4096]{0}', space=vmem, size = 0x1000, scoped, tag = 'output window, operand 2']
    %14 = vsyncpa [#allocation3], 0
    %s15 = scalar_lea.sflag [#allocation3], 1
    %16 = vsyncpa %s15, 0
    %17 = vsyncpa [#allocation6], 0
    %s18 = scalar_lea.sflag [#allocation6], 1
    %19 = vsyncpa %s18, 0
    %20 = vsyncpa [#allocation9], 0
    %21 = vsyncpa [#allocation4], 0
    %s22 = scalar_lea.sflag [#allocation4], 1
    %23 = vsyncpa %s22, 0
    %24 = vsyncpa [#allocation13], 0
    %s25 = scalar_lea.sflag [#allocation13], 1
    %26 = vsyncpa %s25, 0
    loop: start=0, step=1, limit=4
    $region2: #{tpu_custom_call.1} parent=1 // loop_pre_header
      _
    $region3: #{tpu_custom_call.1} parent=1 // loop_header
      %s28 = sphi 0, %s32
      %p29 = scmp.ge.s32.totalorder %s28, 4
      %s35 = sphi 0, %s47
      %s36 = sphi 0, %s43
      %s37 = sphi 0, %s35
      %s38 = sphi 0, %s36
      %s39 = sphi 0, %s37
      %s40 = sphi 0, %s38
      %s52 = sphi 0, %s54
      %s55 = sphi 0, %s52
      %s56 = sphi 0, %s55
      %s72 = sphi 0, %s56
      %s80 = sphi 0, %s82
      %s83 = sphi 0, %s80
      %s84 = sphi 0, %s83
      %s100 = sphi 0, %s84
      %s108 = sphi 0, %s110
      %s111 = sphi 0, %s108
      %s112 = sphi 0, %s111
      %s128 = sphi 0, %s112
      %s132 = sphi 0, %s132
      %s134 = sphi 0, %s132
      %s135 = sphi 0, %s134
      %s149 = sphi 0, %s135
      %s153 = sphi 0, %s153
      %s155 = sphi 0, %s153
      %s156 = sphi 0, %s155
      %s170 = sphi 0, %s156
      %s174 = sphi 0, %s174
      %s176 = sphi 0, %s174
      %s177 = sphi 0, %s176
      %s191 = sphi 0, %s177
      %s199 = sphi 0, %s201
      %s202 = sphi 0, %s199
      %s203 = sphi 0, %s202
      %s219 = sphi 0, %s203
      %s227 = sphi 0, %s229
      %s230 = sphi 0, %s227
      %s231 = sphi 0, %s230
      %s247 = sphi 0, %s231
      %s255 = sphi 0, %s257
      %s258 = sphi 0, %s255
      %s259 = sphi 0, %s258
      %s275 = sphi 0, %s259
    $region4: #{tpu_custom_call.1} parent=1 // loop_header_branch
      %31 = sbr.rel (%p29) target = $region8
    $region5: #{tpu_custom_call.1} parent=1 // loop_body
      %s33 = ssub.s32 %s28, 1
      %s34 = ssub.s32 %s28, 2
      %s41 = sadd.s32 1, %s36
      %p42 = scmp.ge.s32.totalorder %s41, 1
      %s43 = scalar_select %p42, 0, %s41
      %s44 = sadd.s32 1, %s35
      %s45 = scalar_select %p42, %s44, %s35
      %p46 = scmp.ge.s32.totalorder %s45, 2
      %s47 = scalar_select %p46, 0, %s45
      %s48 = ssub.s32 %s35, %s47
      %s49 = ssub.s32 %s36, %s43
      %s50 = sor.u32 %s48, %s49
      %p51 = scmp.eq.s32.totalorder %s50, 0
      %s53 = sadd.s32 %s52, 1
      %s54 = scalar_select %p51, %s52, %s53
      %p57 = pneg %p51
      %p58 = scmp.eq.s32.totalorder %s28, 1
      %p59 = por %p57, %p58
      %p60 = scmp.ne.s32.totalorder %s52, %s55
      %p61 = scmp.eq.s32.totalorder %s28, 0
      %p62 = por %p60, %p61
      %p63 = scmp.ne.s32.totalorder %s52, %s55
      %p64 = scmp.eq.s32.totalorder %s33, 1
      %p65 = por %p63, %p64
      %p66 = scmp.ne.s32.totalorder %s55, %s56
      %p67 = scmp.eq.s32.totalorder %s33, 0
      %p68 = por %p66, %p67
      %p69 = scmp.ne.s32.totalorder %s55, %s56
      %p70 = scmp.eq.s32.totalorder %s34, 1
      %p71 = por %p69, %p70
      %p73 = scmp.ne.s32.totalorder %s56, %s72
      %p74 = scmp.eq.s32.totalorder %s34, 0
      %p75 = por %p73, %p74
      %s76 = ssub.s32 %s35, %s47
      %s77 = ssub.s32 %s36, %s43
      %s78 = sor.u32 %s76, %s77
      %p79 = scmp.eq.s32.totalorder %s78, 0
      %s81 = sadd.s32 %s80, 1
      %s82 = scalar_select %p79, %s80, %s81
      %p85 = pneg %p79
      %p86 = scmp.eq.s32.totalorder %s28, 1
      %p87 = por %p85, %p86
      %p88 = scmp.ne.s32.totalorder %s80, %s83
      %p89 = scmp.eq.s32.totalorder %s28, 0
      %p90 = por %p88, %p89
      %p91 = scmp.ne.s32.totalorder %s80, %s83
      %p92 = scmp.eq.s32.totalorder %s33, 1
      %p93 = por %p91, %p92
      %p94 = scmp.ne.s32.totalorder %s83, %s84
      %p95 = scmp.eq.s32.totalorder %s33, 0
      %p96 = por %p94, %p95
      %p97 = scmp.ne.s32.totalorder %s83, %s84
      %p98 = scmp.eq.s32.totalorder %s34, 1
      %p99 = por %p97, %p98
      %p101 = scmp.ne.s32.totalorder %s84, %s100
      %p102 = scmp.eq.s32.totalorder %s34, 0
      %p103 = por %p101, %p102
      %s104 = ssub.s32 %s35, %s47
      %s105 = ssub.s32 %s36, %s43
      %s106 = sor.u32 %s104, %s105
      %p107 = scmp.eq.s32.totalorder %s106, 0
      %s109 = sadd.s32 %s108, 1
      %s110 = scalar_select %p107, %s108, %s109
      %p113 = pneg %p107
      %p114 = scmp.eq.s32.totalorder %s28, 1
      %p115 = por %p113, %p114
      %p116 = scmp.ne.s32.totalorder %s108, %s111
      %p117 = scmp.eq.s32.totalorder %s28, 0
      %p118 = por %p116, %p117
      %p119 = scmp.ne.s32.totalorder %s108, %s111
      %p120 = scmp.eq.s32.totalorder %s33, 1
      %p121 = por %p119, %p120
      %p122 = scmp.ne.s32.totalorder %s111, %s112
      %p123 = scmp.eq.s32.totalorder %s33, 0
      %p124 = por %p122, %p123
      %p125 = scmp.ne.s32.totalorder %s111, %s112
      %p126 = scmp.eq.s32.totalorder %s34, 1
      %p127 = por %p125, %p126
      %p129 = scmp.ne.s32.totalorder %s112, %s128
      %p130 = scmp.eq.s32.totalorder %s34, 0
      %p131 = por %p129, %p130
      %s133 = sadd.s32 %s132, 1
      %p136 = scmp.eq.s32.totalorder %s28, 1
      %p137 = scmp.ne.s32.totalorder %s132, %s134
      %p138 = scmp.eq.s32.totalorder %s28, 0
      %p139 = por %p137, %p138
      %p140 = scmp.ne.s32.totalorder %s132, %s134
      %p141 = scmp.eq.s32.totalorder %s33, 1
      %p142 = por %p140, %p141
      %p143 = scmp.ne.s32.totalorder %s134, %s135
      %p144 = scmp.eq.s32.totalorder %s33, 0
      %p145 = por %p143, %p144
      %p146 = scmp.ne.s32.totalorder %s134, %s135
      %p147 = scmp.eq.s32.totalorder %s34, 1
      %p148 = por %p146, %p147
      %p150 = scmp.ne.s32.totalorder %s135, %s149
      %p151 = scmp.eq.s32.totalorder %s34, 0
      %p152 = por %p150, %p151
      %s154 = sadd.s32 %s153, 1
      %p157 = scmp.eq.s32.totalorder %s28, 1
      %p158 = scmp.ne.s32.totalorder %s153, %s155
      %p159 = scmp.eq.s32.totalorder %s28, 0
      %p160 = por %p158, %p159
      %p161 = scmp.ne.s32.totalorder %s153, %s155
      %p162 = scmp.eq.s32.totalorder %s33, 1
      %p163 = por %p161, %p162
      %p164 = scmp.ne.s32.totalorder %s155, %s156
      %p165 = scmp.eq.s32.totalorder %s33, 0
      %p166 = por %p164, %p165
      %p167 = scmp.ne.s32.totalorder %s155, %s156
      %p168 = scmp.eq.s32.totalorder %s34, 1
      %p169 = por %p167, %p168
      %p171 = scmp.ne.s32.totalorder %s156, %s170
      %p172 = scmp.eq.s32.totalorder %s34, 0
      %p173 = por %p171, %p172
      %s175 = sadd.s32 %s174, 1
      %p178 = scmp.eq.s32.totalorder %s28, 1
      %p179 = scmp.ne.s32.totalorder %s174, %s176
      %p180 = scmp.eq.s32.totalorder %s28, 0
      %p181 = por %p179, %p180
      %p182 = scmp.ne.s32.totalorder %s174, %s176
      %p183 = scmp.eq.s32.totalorder %s33, 1
      %p184 = por %p182, %p183
      %p185 = scmp.ne.s32.totalorder %s176, %s177
      %p186 = scmp.eq.s32.totalorder %s33, 0
      %p187 = por %p185, %p186
      %p188 = scmp.ne.s32.totalorder %s176, %s177
      %p189 = scmp.eq.s32.totalorder %s34, 1
      %p190 = por %p188, %p189
      %p192 = scmp.ne.s32.totalorder %s177, %s191
      %p193 = scmp.eq.s32.totalorder %s34, 0
      %p194 = por %p192, %p193
      %s195 = ssub.s32 %s35, %s47
      %s196 = ssub.s32 %s36, %s43
      %s197 = sor.u32 %s195, %s196
      %p198 = scmp.eq.s32.totalorder %s197, 0
      %s200 = sadd.s32 %s199, 1
      %s201 = scalar_select %p198, %s199, %s200
      %p204 = pneg %p198
      %p205 = scmp.eq.s32.totalorder %s28, 1
      %p206 = por %p204, %p205
      %p207 = scmp.ne.s32.totalorder %s199, %s202
      %p208 = scmp.eq.s32.totalorder %s28, 0
      %p209 = por %p207, %p208
      %p210 = scmp.ne.s32.totalorder %s199, %s202
      %p211 = scmp.eq.s32.totalorder %s33, 1
      %p212 = por %p210, %p211
      %p213 = scmp.ne.s32.totalorder %s202, %s203
      %p214 = scmp.eq.s32.totalorder %s33, 0
      %p215 = por %p213, %p214
      %p216 = scmp.ne.s32.totalorder %s202, %s203
      %p217 = scmp.eq.s32.totalorder %s34, 1
      %p218 = por %p216, %p217
      %p220 = scmp.ne.s32.totalorder %s203, %s219
      %p221 = scmp.eq.s32.totalorder %s34, 0
      %p222 = por %p220, %p221
      %s223 = ssub.s32 %s35, %s47
      %s224 = ssub.s32 %s36, %s43
      %s225 = sor.u32 %s223, %s224
      %p226 = scmp.eq.s32.totalorder %s225, 0
      %s228 = sadd.s32 %s227, 1
      %s229 = scalar_select %p226, %s227, %s228
      %p232 = pneg %p226
      %p233 = scmp.eq.s32.totalorder %s28, 1
      %p234 = por %p232, %p233
      %p235 = scmp.ne.s32.totalorder %s227, %s230
      %p236 = scmp.eq.s32.totalorder %s28, 0
      %p237 = por %p235, %p236
      %p238 = scmp.ne.s32.totalorder %s227, %s230
      %p239 = scmp.eq.s32.totalorder %s33, 1
      %p240 = por %p238, %p239
      %p241 = scmp.ne.s32.totalorder %s230, %s231
      %p242 = scmp.eq.s32.totalorder %s33, 0
      %p243 = por %p241, %p242
      %p244 = scmp.ne.s32.totalorder %s230, %s231
      %p245 = scmp.eq.s32.totalorder %s34, 1
      %p246 = por %p244, %p245
      %p248 = scmp.ne.s32.totalorder %s231, %s247
      %p249 = scmp.eq.s32.totalorder %s34, 0
      %p250 = por %p248, %p249
      %s251 = ssub.s32 %s35, %s47
      %s252 = ssub.s32 %s36, %s43
      %s253 = sor.u32 %s251, %s252
      %p254 = scmp.eq.s32.totalorder %s253, 0
      %s256 = sadd.s32 %s255, 1
      %s257 = scalar_select %p254, %s255, %s256
      %p260 = pneg %p254
      %p261 = scmp.eq.s32.totalorder %s28, 1
      %p262 = por %p260, %p261
      %p263 = scmp.ne.s32.totalorder %s255, %s258
      %p264 = scmp.eq.s32.totalorder %s28, 0
      %p265 = por %p263, %p264
      %p266 = scmp.ne.s32.totalorder %s255, %s258
      %p267 = scmp.eq.s32.totalorder %s33, 1
      %p268 = por %p266, %p267
      %p269 = scmp.ne.s32.totalorder %s258, %s259
      %p270 = scmp.eq.s32.totalorder %s33, 0
      %p271 = por %p269, %p270
      %p272 = scmp.ne.s32.totalorder %s258, %s259
      %p273 = scmp.eq.s32.totalorder %s34, 1
      %p274 = por %p272, %p273
      %p276 = scmp.ne.s32.totalorder %s259, %s275
      %p277 = scmp.eq.s32.totalorder %s34, 0
      %p278 = por %p276, %p277
      %p279 = scmp.le.s32.totalorder 1, %s28
      %p280 = scmp.lt.s32.totalorder %s28, 3
      %p281 = pnand %p279, %p280
      %p282 = pneg %p281
      // Predicated region
      $region9: #{tpu_custom_call.1} parent=5 // pred_check
        _
      $region10: #{tpu_custom_call.1} parent=5 // pred_check_branch
        %284 = sbr.rel (%p281) target = $region12
      $region11: #{tpu_custom_call.1} parent=5 // pred_region
        %s285 = ssub.s32 %s28, 1
        // Predicated region
        $region13: #{tpu_custom_call.1} parent=11 // pred_check
          %p286 = pneg %p145
        $region14: #{tpu_custom_call.1} parent=11 // pred_check_branch
          %288 = sbr.rel (%p286) target = $region16
        $region15: #{tpu_custom_call.1} parent=11 // pred_region
          %s290 = ssub.s32 256, 256
          %291 = vsyncadd [#allocation9], %s290
          %s292 = sshll.u32 [#allocation8], 4
          %s293 = int_to_ptr.vmem [resolvable:$true] %s292
          %298 = dma.hbm_to_vmem [thread:$0]  %s3, 256, %s293, [#allocation9], 64, 64, 4
        $region16: #{tpu_custom_call.1} parent=11 // pred_fallthru
          _
        // Predicated region
        $region17: #{tpu_custom_call.1} parent=11 // pred_check
          %p299 = pneg %p166
        $region18: #{tpu_custom_call.1} parent=11 // pred_check_branch
          %301 = sbr.rel (%p299) target = $region20
        $region19: #{tpu_custom_call.1} parent=11 // pred_region
          %s303 = ssub.s32 256, 256
          %304 = vsyncadd [#allocation9], %s303
          %s305 = sshll.u32 [#allocation10], 4
          %s306 = int_to_ptr.vmem [resolvable:$true] %s305
          %311 = dma.hbm_to_vmem [thread:$0]  %s4, 256, %s306, [#allocation9], 64, 64, 4
        $region20: #{tpu_custom_call.1} parent=11 // pred_fallthru
          _
        // Predicated region
        $region21: #{tpu_custom_call.1} parent=11 // pred_check
          %p312 = pneg %p187
        $region22: #{tpu_custom_call.1} parent=11 // pred_check_branch
          %314 = sbr.rel (%p312) target = $region24
        $region23: #{tpu_custom_call.1} parent=11 // pred_region
          _
        $region24: #{tpu_custom_call.1} parent=11 // pred_fallthru
          _
      $region12: #{tpu_custom_call.1} parent=5 // pred_fallthru
        _
      %p315 = scmp.lt.s32.totalorder %s28, 2
      // Predicated region
      $region25: #{tpu_custom_call.1} parent=5 // pred_check
        %p316 = pneg %p315
      $region26: #{tpu_custom_call.1} parent=5 // pred_check_branch
        %318 = sbr.rel (%p316) target = $region28
      $region27: #{tpu_custom_call.1} parent=5 // pred_region
        // Predicated region
        $region29: #{tpu_custom_call.1} parent=27 // pred_check
          %p319 = pneg %p62
        $region30: #{tpu_custom_call.1} parent=27 // pred_check_branch
          %321 = sbr.rel (%p319) target = $region32
        $region31: #{tpu_custom_call.1} parent=27 // pred_region
          %s322 = sand.u32 %s52, 1
          %s323 = scalar_lea.sflag [#allocation3], %s322
          %s324 = sand.u32 %s52, 1
          %s325 = smul.addr %s324, 4
          %s326 = scalar_lea.vmem [#allocation2], %s325
          %s328 = ssub.s32 64, 64
          %329 = vsyncadd %s323, %s328
          %s330 = sadd.s32 %s36, %s35
          %s331 = smul.addr %s330, 64
          %s332 = scalar_lea.hbm %s0, %s331
          %s334 = sshll.u32 %s326, 4
          %s335 = int_to_ptr.vmem [resolvable:$true] %s334
          %337 = dma.hbm_to_vmem [thread:$0]  %s332, 64, %s335, %s323
        $region32: #{tpu_custom_call.1} parent=27 // pred_fallthru
          _
        // Predicated region
        $region33: #{tpu_custom_call.1} parent=27 // pred_check
          %p338 = pneg %p90
        $region34: #{tpu_custom_call.1} parent=27 // pred_check_branch
          %340 = sbr.rel (%p338) target = $region36
        $region35: #{tpu_custom_call.1} parent=27 // pred_region
          %s341 = sand.u32 %s28, 1
          %s342 = scalar_lea.sflag [#allocation6], %s341
          %s343 = sand.u32 %s80, 1
          %s344 = smul.addr %s343, 4
          %s345 = scalar_lea.vmem [#allocation5], %s344
          %s347 = ssub.s32 64, 64
          %348 = vsyncadd %s342, %s347
          %s349 = sadd.s32 %s36, %s35
          %s350 = smul.addr %s349, 64
          %s351 = scalar_lea.hbm %s1, %s350
          %s353 = sshll.u32 %s345, 4
          %s354 = int_to_ptr.vmem [resolvable:$true] %s353
          %356 = dma.hbm_to_vmem [thread:$0]  %s351, 64, %s354, %s342
        $region36: #{tpu_custom_call.1} parent=27 // pred_fallthru
          _
        // Predicated region
        $region37: #{tpu_custom_call.1} parent=27 // pred_check
          %p357 = pneg %p118
        $region38: #{tpu_custom_call.1} parent=27 // pred_check_branch
          %359 = sbr.rel (%p357) target = $region40
        $region39: #{tpu_custom_call.1} parent=27 // pred_region
          %s360 = sand.u32 %s28, 1
          %s361 = scalar_lea.sflag [#allocation6], %s360
          %s362 = sand.u32 %s108, 1
          %s363 = smul.addr %s362, 4
          %s364 = scalar_lea.vmem [#allocation7], %s363
          %s366 = ssub.s32 64, 64
          %367 = vsyncadd %s361, %s366
          %s368 = sadd.s32 %s36, %s35
          %s369 = smul.addr %s368, 64
          %s370 = scalar_lea.hbm %s2, %s369
          %s372 = sshll.u32 %s364, 4
          %s373 = int_to_ptr.vmem [resolvable:$true] %s372
          %375 = dma.hbm_to_vmem [thread:$0]  %s370, 64, %s373, %s361
        $region40: #{tpu_custom_call.1} parent=27 // pred_fallthru
          _
      $region28: #{tpu_custom_call.1} parent=5 // pred_fallthru
        _
      %p376 = scmp.le.s32.totalorder 1, %s28
      %p377 = scmp.lt.s32.totalorder %s28, 3
      %p378 = pnand %p376, %p377
      %p379 = pneg %p378
      // Predicated region
      $region41: #{tpu_custom_call.1} parent=5 // pred_check
        _
      $region42: #{tpu_custom_call.1} parent=5 // pred_check_branch
        %381 = sbr.rel (%p378) target = $region44
      $region43: #{tpu_custom_call.1} parent=5 // pred_region
        %s382 = ssub.s32 %s28, 1
        %s383 = sand.u32 %s55, 1
        %s384 = scalar_lea.sflag [#allocation3], %s383
        %s385 = sand.u32 %s55, 1
        %s386 = smul.addr %s385, 4
        %s387 = scalar_lea.vmem [#allocation2], %s386
        // Predicated region
        $region45: #{tpu_custom_call.1} parent=43 // pred_check
          %p388 = pneg %p68
        $region46: #{tpu_custom_call.1} parent=43 // pred_check_branch
          %390 = sbr.rel (%p388) target = $region48
        $region47: #{tpu_custom_call.1} parent=43 // pred_region
          %391 = dma.done %s384, 64
        $region48: #{tpu_custom_call.1} parent=43 // pred_fallthru
          _
        %s392 = sand.u32 %s33, 1
        %s393 = scalar_lea.sflag [#allocation6], %s392
        %s394 = sand.u32 %s83, 1
        %s395 = smul.addr %s394, 4
        %s396 = scalar_lea.vmem [#allocation5], %s395
        // Predicated region
        $region49: #{tpu_custom_call.1} parent=43 // pred_check
          %p397 = pneg %p96
        $region50: #{tpu_custom_call.1} parent=43 // pred_check_branch
          %399 = sbr.rel (%p397) target = $region52
        $region51: #{tpu_custom_call.1} parent=43 // pred_region
          %400 = dma.done %s393, 64
        $region52: #{tpu_custom_call.1} parent=43 // pred_fallthru
          _
        %s401 = sand.u32 %s33, 1
        %s402 = scalar_lea.sflag [#allocation6], %s401
        %s403 = sand.u32 %s111, 1
        %s404 = smul.addr %s403, 4
        %s405 = scalar_lea.vmem [#allocation7], %s404
        // Predicated region
        $region53: #{tpu_custom_call.1} parent=43 // pred_check
          %p406 = pneg %p124
        $region54: #{tpu_custom_call.1} parent=43 // pred_check_branch
          %408 = sbr.rel (%p406) target = $region56
        $region55: #{tpu_custom_call.1} parent=43 // pred_region
          %409 = dma.done %s402, 64
        $region56: #{tpu_custom_call.1} parent=43 // pred_fallthru
          _
        // Predicated region
        $region57: #{tpu_custom_call.1} parent=43 // pred_check
          %p410 = pneg %p145
        $region58: #{tpu_custom_call.1} parent=43 // pred_check_branch
          %412 = sbr.rel (%p410) target = $region60
        $region59: #{tpu_custom_call.1} parent=43 // pred_region
          %413 = dma.done [#allocation9], 256
        $region60: #{tpu_custom_call.1} parent=43 // pred_fallthru
          _
        // Predicated region
        $region61: #{tpu_custom_call.1} parent=43 // pred_check
          %p414 = pneg %p166
        $region62: #{tpu_custom_call.1} parent=43 // pred_check_branch
          %416 = sbr.rel (%p414) target = $region64
        $region63: #{tpu_custom_call.1} parent=43 // pred_region
          %417 = dma.done [#allocation9], 256
        $region64: #{tpu_custom_call.1} parent=43 // pred_fallthru
          _
        %s418 = sand.u32 %s55, 1
        %s419 = scalar_lea.sflag [#allocation3], %s418
        %s420 = sand.u32 %s55, 1
        %s421 = smul.addr %s420, 4
        %s422 = scalar_lea.vmem [#allocation2], %s421
        %p423 = pneg %p68
        %p424 = pneg %p65
        %s425 = sand.u32 %s33, 1
        %s426 = scalar_lea.sflag [#allocation6], %s425
        %s427 = sand.u32 %s83, 1
        %s428 = smul.addr %s427, 4
        %s429 = scalar_lea.vmem [#allocation5], %s428
        %p430 = pneg %p96
        %p431 = pneg %p93
        %s432 = sand.u32 %s33, 1
        %s433 = scalar_lea.sflag [#allocation6], %s432
        %s434 = sand.u32 %s111, 1
        %s435 = smul.addr %s434, 4
        %s436 = scalar_lea.vmem [#allocation7], %s435
        %p437 = pneg %p124
        %p438 = pneg %p121
        %p439 = pneg %p145
        %p440 = pneg %p142
        %p441 = pneg %p166
        %p442 = pneg %p163
        %p443 = pneg %p187
        %p444 = pneg %p184
        %p445 = pneg %p215
        %p446 = pneg %p212
        %s447 = sand.u32 %s202, 1
        %s448 = scalar_lea.sflag [#allocation4], %s447
        %s449 = sand.u32 %s202, 1
        %s450 = smul.addr %s449, 4
        %s451 = scalar_lea.vmem [#allocation11], %s450
        %p452 = pneg %p243
        %p453 = pneg %p240
        %s454 = sand.u32 %s33, 1
        %s455 = scalar_lea.sflag [#allocation13], %s454
        %s456 = sand.u32 %s230, 1
        %s457 = smul.addr %s456, 4
        %s458 = scalar_lea.vmem [#allocation12], %s457
        %p459 = pneg %p271
        %p460 = pneg %p268
        %s461 = sand.u32 %s33, 1
        %s462 = scalar_lea.sflag [#allocation13], %s461
        %s463 = sand.u32 %s258, 1
        %s464 = smul.addr %s463, 4
        %s465 = scalar_lea.vmem [#allocation14], %s464
        %v467 = vld [vmem:[%s387] sm:$0xf]
        %v468 = vld [vmem:[#allocation8] sm:$0xf]
        %v469 = vld [vmem:[#allocation8 + $0x4] sm:$0xf]
        %v470 = vld [vmem:[#allocation8 + $0x8] sm:$0xf]
        %v471 = vld [vmem:[#allocation8 + $0xc] sm:$0xf]
        %v476 = vunpack.c.l.b16 %v468
        %v477 = vunpack.c.l.b16 %v469
        %v478 = vunpack.c.l.b16 %v470
        %v479 = vunpack.c.l.b16 %v471
        %v480 = vpack.c.b16 %v477, %v476
        %v481 = vpack.c.b16 %v479, %v478
        %vm484 = vcmask 261120
        %v486 = vsel %vm484, %v467, 0
        %488 = vmatprep.subr.bf16.mxu0 0
        %489 = vmatpush1.bf16.msra.mxu0 %v480
        %490 = vmatprep.subr.bf16.mxu0 0
        %491 = vmatpush1.bf16.msra.mxu0 %v481
        %492 = vmatprep.subr.bf16.mxu0 0
        %493 = vmatpush1.bf16.msra.mxu0 0
        %494 = vmatprep.subr.bf16.mxu0 0
        %495 = vmatpush1.bf16.msra.mxu0 0
        %496 = vmatprep.subr.bf16.mxu0 0
        %497 = vmatpush1.bf16.msra.mxu0 0
        %498 = vmatprep.subr.bf16.mxu0 0
        %499 = vmatpush1.bf16.msra.mxu0 0
        %500 = vmatprep.subr.bf16.mxu0 0
        %501 = vmatpush1.bf16.msra.mxu0 0
        %502 = vmatprep.subr.bf16.mxu0 0
        %503 = vmatpush1.bf16.msra.mxu0 0
        %504 = vmatprep.subr.bf16.mxu0 0
        %505 = vmatpush1.bf16.msra.mxu0 0
        %506 = vmatprep.subr.bf16.mxu0 0
        %507 = vmatpush1.bf16.msra.mxu0 0
        %508 = vmatprep.subr.bf16.mxu0 0
        %509 = vmatpush1.bf16.msra.mxu0 0
        %510 = vmatprep.subr.bf16.mxu0 0
        %511 = vmatpush1.bf16.msra.mxu0 0
        %512 = vmatprep.subr.bf16.mxu0 0
        %513 = vmatpush1.bf16.msra.mxu0 0
        %514 = vmatprep.subr.bf16.mxu0 0
        %515 = vmatpush1.bf16.msra.mxu0 0
        %516 = vmatprep.subr.bf16.mxu0 0
        %517 = vmatpush1.bf16.msra.mxu0 0
        %518 = vmatprep.subr.bf16.mxu0 0
        %519 = vmatpush1.bf16.msra.mxu0 0
        %520 = vmatprep.mubr.bf16.mxu0 0
        %521 = vmatmul.mubr.bf16.gmra.mrb[0].mxu0 %v486
        %v522 = vpop.f32.mrb[0].mxu0
        %v523 = vadd.f32 0.0, %v522
        %v524 = vpop.f32.mrb[0].mxu0
        %v525 = vpop.f32.mrb[0].mxu0
        %v526 = vpop.f32.mrb[0].mxu0
        %527 = vdwg.mxu0
        %v528 = vpack.c.bf16 %v523, %v523
        %vm529 = vcmask 257024
        %530 = vst.msk [vmem:[%s451] sm:$0xf] %vm529, %v528
        %v531 = vld [vmem:[%s396] sm:$0xf]
        %v532 = vld [vmem:[#allocation10] sm:$0xf]
        %v533 = vld [vmem:[#allocation10 + $0x4] sm:$0xf]
        %v534 = vld [vmem:[#allocation10 + $0x8] sm:$0xf]
        %v535 = vld [vmem:[#allocation10 + $0xc] sm:$0xf]
        %v540 = vunpack.c.l.b16 %v532
        %v541 = vunpack.c.l.b16 %v533
        %v542 = vunpack.c.l.b16 %v534
        %v543 = vunpack.c.l.b16 %v535
        %v544 = vpack.c.b16 %v541, %v540
        %v545 = vpack.c.b16 %v543, %v542
        %v549 = vsel %vm484, %v531, 0
        %551 = vmatprep.subr.bf16.mxu0 0
        %552 = vmatpush1.bf16.msra.mxu0 %v544
        %553 = vmatprep.subr.bf16.mxu0 0
        %554 = vmatpush1.bf16.msra.mxu0 %v545
        %555 = vmatprep.subr.bf16.mxu0 0
        %556 = vmatpush1.bf16.msra.mxu0 0
        %557 = vmatprep.subr.bf16.mxu0 0
        %558 = vmatpush1.bf16.msra.mxu0 0
        %559 = vmatprep.subr.bf16.mxu0 0
        %560 = vmatpush1.bf16.msra.mxu0 0
        %561 = vmatprep.subr.bf16.mxu0 0
        %562 = vmatpush1.bf16.msra.mxu0 0
        %563 = vmatprep.subr.bf16.mxu0 0
        %564 = vmatpush1.bf16.msra.mxu0 0
        %565 = vmatprep.subr.bf16.mxu0 0
        %566 = vmatpush1.bf16.msra.mxu0 0
        %567 = vmatprep.subr.bf16.mxu0 0
        %568 = vmatpush1.bf16.msra.mxu0 0
        %569 = vmatprep.subr.bf16.mxu0 0
        %570 = vmatpush1.bf16.msra.mxu0 0
        %571 = vmatprep.subr.bf16.mxu0 0
        %572 = vmatpush1.bf16.msra.mxu0 0
        %573 = vmatprep.subr.bf16.mxu0 0
        %574 = vmatpush1.bf16.msra.mxu0 0
        %575 = vmatprep.subr.bf16.mxu0 0
        %576 = vmatpush1.bf16.msra.mxu0 0
        %577 = vmatprep.subr.bf16.mxu0 0
        %578 = vmatpush1.bf16.msra.mxu0 0
        %579 = vmatprep.subr.bf16.mxu0 0
        %580 = vmatpush1.bf16.msra.mxu0 0
        %581 = vmatprep.subr.bf16.mxu0 0
        %582 = vmatpush1.bf16.msra.mxu0 0
        %583 = vmatprep.mubr.bf16.mxu0 0
        %584 = vmatmul.mubr.bf16.gmra.mrb[0].mxu0 %v549
        %v585 = vpop.f32.mrb[0].mxu0
        %v586 = vadd.f32 0.0, %v585
        %v587 = vpop.f32.mrb[0].mxu0
        %v588 = vpop.f32.mrb[0].mxu0
        %v589 = vpop.f32.mrb[0].mxu0
        %590 = vdwg.mxu0
        %v591 = vpack.c.bf16 %v586, %v586
        %592 = vst.msk [vmem:[%s458] sm:$0xf] %vm529, %v591
        %v593 = vld [vmem:[%s405] sm:$0xf]
        %v594 = vld [vmem:[%s5] sm:$0xf]
        %v595 = vld [vmem:[%s5 + $0x4] sm:$0xf]
        %v596 = vld [vmem:[%s5 + $0x8] sm:$0xf]
        %v597 = vld [vmem:[%s5 + $0xc] sm:$0xf]
        %v602 = vunpack.c.l.b16 %v594
        %v603 = vunpack.c.l.b16 %v595
        %v604 = vunpack.c.l.b16 %v596
        %v605 = vunpack.c.l.b16 %v597
        %v606 = vpack.c.b16 %v603, %v602
        %v607 = vpack.c.b16 %v605, %v604
        %v611 = vsel %vm484, %v593, 0
        %613 = vmatprep.subr.bf16.mxu0 0
        %614 = vmatpush1.bf16.msra.mxu0 %v606
        %615 = vmatprep.subr.bf16.mxu0 0
        %616 = vmatpush1.bf16.msra.mxu0 %v607
        %617 = vmatprep.subr.bf16.mxu0 0
        %618 = vmatpush1.bf16.msra.mxu0 0
        %619 = vmatprep.subr.bf16.mxu0 0
        %620 = vmatpush1.bf16.msra.mxu0 0
        %621 = vmatprep.subr.bf16.mxu0 0
        %622 = vmatpush1.bf16.msra.mxu0 0
        %623 = vmatprep.subr.bf16.mxu0 0
        %624 = vmatpush1.bf16.msra.mxu0 0
        %625 = vmatprep.subr.bf16.mxu0 0
        %626 = vmatpush1.bf16.msra.mxu0 0
        %627 = vmatprep.subr.bf16.mxu0 0
        %628 = vmatpush1.bf16.msra.mxu0 0
        %629 = vmatprep.subr.bf16.mxu0 0
        %630 = vmatpush1.bf16.msra.mxu0 0
        %631 = vmatprep.subr.bf16.mxu0 0
        %632 = vmatpush1.bf16.msra.mxu0 0
        %633 = vmatprep.subr.bf16.mxu0 0
        %634 = vmatpush1.bf16.msra.mxu0 0
        %635 = vmatprep.subr.bf16.mxu0 0
        %636 = vmatpush1.bf16.msra.mxu0 0
        %637 = vmatprep.subr.bf16.mxu0 0
        %638 = vmatpush1.bf16.msra.mxu0 0
        %639 = vmatprep.subr.bf16.mxu0 0
        %640 = vmatpush1.bf16.msra.mxu0 0
        %641 = vmatprep.subr.bf16.mxu0 0
        %642 = vmatpush1.bf16.msra.mxu0 0
        %643 = vmatprep.subr.bf16.mxu0 0
        %644 = vmatpush1.bf16.msra.mxu0 0
        %645 = vmatprep.mubr.bf16.mxu0 0
        %646 = vmatmul.mubr.bf16.gmra.mrb[0].mxu0 %v611
        %v647 = vpop.f32.mrb[0].mxu0
        %v648 = vadd.f32 0.0, %v647
        %v649 = vpop.f32.mrb[0].mxu0
        %v650 = vpop.f32.mrb[0].mxu0
        %v651 = vpop.f32.mrb[0].mxu0
        %652 = vdwg.mxu0
        %v653 = vpack.c.bf16 %v648, %v648
        %654 = vst.msk [vmem:[%s465] sm:$0xf] %vm529, %v653
        %s655 = sand.u32 %s202, 1
        %s656 = scalar_lea.sflag [#allocation4], %s655
        %s657 = sand.u32 %s202, 1
        %s658 = smul.addr %s657, 4
        %s659 = scalar_lea.vmem [#allocation11], %s658
        %s660 = sand.u32 %s33, 1
        %s661 = scalar_lea.sflag [#allocation13], %s660
        %s662 = sand.u32 %s230, 1
        %s663 = smul.addr %s662, 4
        %s664 = scalar_lea.vmem [#allocation12], %s663
        %s665 = sand.u32 %s33, 1
        %s666 = scalar_lea.sflag [#allocation13], %s665
        %s667 = sand.u32 %s258, 1
        %s668 = smul.addr %s667, 4
        %s669 = scalar_lea.vmem [#allocation14], %s668
        // Predicated region
        $region65: #{tpu_custom_call.1} parent=43 // pred_check
          %p670 = pneg %p212
        $region66: #{tpu_custom_call.1} parent=43 // pred_check_branch
          %672 = sbr.rel (%p670) target = $region68
        $region67: #{tpu_custom_call.1} parent=43 // pred_region
          %s674 = ssub.s32 64, 64
          %675 = vsyncadd %s656, %s674
          %s676 = sadd.s32 %s38, %s37
          %s677 = smul.addr %s676, 64
          %s678 = scalar_lea.hbm %s6, %s677
          %s680 = sshll.u32 %s659, 4
          %s681 = int_to_ptr.vmem [resolvable:$true] %s680
          %683 = dma.vmem_to_hbm [thread:$0]  %s681, 64, %s678, %s656
        $region68: #{tpu_custom_call.1} parent=43 // pred_fallthru
          _
        // Predicated region
        $region69: #{tpu_custom_call.1} parent=43 // pred_check
          %p684 = pneg %p240
        $region70: #{tpu_custom_call.1} parent=43 // pred_check_branch
          %686 = sbr.rel (%p684) target = $region72
        $region71: #{tpu_custom_call.1} parent=43 // pred_region
          %s688 = ssub.s32 64, 64
          %689 = vsyncadd %s661, %s688
          %s690 = sadd.s32 %s38, %s37
          %s691 = smul.addr %s690, 64
          %s692 = scalar_lea.hbm %s7, %s691
          %s694 = sshll.u32 %s664, 4
          %s695 = int_to_ptr.vmem [resolvable:$true] %s694
          %697 = dma.vmem_to_hbm [thread:$0]  %s695, 64, %s692, %s661
        $region72: #{tpu_custom_call.1} parent=43 // pred_fallthru
          _
        // Predicated region
        $region73: #{tpu_custom_call.1} parent=43 // pred_check
          %p698 = pneg %p268
        $region74: #{tpu_custom_call.1} parent=43 // pred_check_branch
          %700 = sbr.rel (%p698) target = $region76
        $region75: #{tpu_custom_call.1} parent=43 // pred_region
          %s702 = ssub.s32 64, 64
          %703 = vsyncadd %s666, %s702
          %s704 = sadd.s32 %s38, %s37
          %s705 = smul.addr %s704, 64
          %s706 = scalar_lea.hbm %s8, %s705
          %s708 = sshll.u32 %s669, 4
          %s709 = int_to_ptr.vmem [resolvable:$true] %s708
          %711 = dma.vmem_to_hbm [thread:$0]  %s709, 64, %s706, %s666
        $region76: #{tpu_custom_call.1} parent=43 // pred_fallthru
          _
      $region44: #{tpu_custom_call.1} parent=5 // pred_fallthru
        _
      %p712 = scmp.le.s32.totalorder 2, %s28
      // Predicated region
      $region77: #{tpu_custom_call.1} parent=5 // pred_check
        %p713 = pneg %p712
      $region78: #{tpu_custom_call.1} parent=5 // pred_check_branch
        %715 = sbr.rel (%p713) target = $region80
      $region79: #{tpu_custom_call.1} parent=5 // pred_region
        %s716 = ssub.s32 %s28, 2
        // Predicated region
        $region81: #{tpu_custom_call.1} parent=79 // pred_check
          %p717 = pneg %p218
        $region82: #{tpu_custom_call.1} parent=79 // pred_check_branch
          %719 = sbr.rel (%p717) target = $region84
        $region83: #{tpu_custom_call.1} parent=79 // pred_region
          %s720 = sand.u32 %s203, 1
          %s721 = scalar_lea.sflag [#allocation4], %s720
          %s722 = sand.u32 %s203, 1
          %s723 = smul.addr %s722, 4
          %s724 = scalar_lea.vmem [#allocation11], %s723
          %725 = dma.done %s721, 64
        $region84: #{tpu_custom_call.1} parent=79 // pred_fallthru
          _
        // Predicated region
        $region85: #{tpu_custom_call.1} parent=79 // pred_check
          %p726 = pneg %p246
        $region86: #{tpu_custom_call.1} parent=79 // pred_check_branch
          %728 = sbr.rel (%p726) target = $region88
        $region87: #{tpu_custom_call.1} parent=79 // pred_region
          %s729 = sand.u32 %s34, 1
          %s730 = scalar_lea.sflag [#allocation13], %s729
          %s731 = sand.u32 %s231, 1
          %s732 = smul.addr %s731, 4
          %s733 = scalar_lea.vmem [#allocation12], %s732
          %734 = dma.done %s730, 64
        $region88: #{tpu_custom_call.1} parent=79 // pred_fallthru
          _
        // Predicated region
        $region89: #{tpu_custom_call.1} parent=79 // pred_check
          %p735 = pneg %p274
        $region90: #{tpu_custom_call.1} parent=79 // pred_check_branch
          %737 = sbr.rel (%p735) target = $region92
        $region91: #{tpu_custom_call.1} parent=79 // pred_region
          %s738 = sand.u32 %s34, 1
          %s739 = scalar_lea.sflag [#allocation13], %s738
          %s740 = sand.u32 %s259, 1
          %s741 = smul.addr %s740, 4
          %s742 = scalar_lea.vmem [#allocation14], %s741
          %743 = dma.done %s739, 64
        $region92: #{tpu_custom_call.1} parent=79 // pred_fallthru
          _
      $region80: #{tpu_custom_call.1} parent=5 // pred_fallthru
        _
    $region6: #{tpu_custom_call.1} parent=1 // loop_footer
      %s32 = sadd.s32 1, %s28
    $region7: #{tpu_custom_call.1} parent=1 // loop_footer_branch
      %27 = sbr.rel target = $region3
    $region8: #{tpu_custom_call.1} parent=1 // loop_exit
      _
    %744 = vsyncpa [#allocation3], 1
    %s745 = scalar_lea.sflag [#allocation3], 1
    %746 = vsyncpa %s745, 1
    %747 = vsyncpa [#allocation6], 1
    %s748 = scalar_lea.sflag [#allocation6], 1
    %749 = vsyncpa %s748, 1
    %750 = vsyncpa [#allocation9], 1
    %751 = vsyncpa [#allocation4], 1
    %s752 = scalar_lea.sflag [#allocation4], 1
    %753 = vsyncpa %s752, 1
    %754 = vsyncpa [#allocation13], 1
    %s755 = scalar_lea.sflag [#allocation13], 1
    %756 = vsyncpa %s755, 1

</llo_original>
